<compile_context>
chip_gen: v7x
topology: tpu7x:2x2x1
jax: 0.10.0
libtpu: 0.0.40
codegen_flags: <defaults>
</compile_context>

<pallas_src>
import jax
import jax.numpy as jnp
from jax.experimental import pallas as pl
from jax.experimental.pallas import tpu as pltpu

C_IN = 256   # fixed by the module (fc1 in_channels / fc2 out_channels)
C_MID = 64   # fixed by the module (fc1 out_channels / fc2 in_channels)


def se_kernel(x_ref, w1t_ref, b1_ref, w2t_ref, b2_ref, o_ref):
    # x_ref: (BT, C_IN, L)   w1t: (C_IN, C_MID)   b1: (1, C_MID)
    # w2t: (C_MID, C_IN)     b2: (1, C_IN)        o_ref: (BT, C_IN, L)
    x = x_ref[...]
    xf = x.astype(jnp.float32)                     # f32 accumulation even for bf16 inputs

    # Squeeze: global average pool over the length (lane) axis -> (BT, C_IN).
    pooled = jnp.mean(xf, axis=2)

    # Excitation: 1x1 convs as MXU matmuls with M=BT, lane-dense intermediates.
    h = jnp.dot(pooled, w1t_ref[...],
                preferred_element_type=jnp.float32) + b1_ref[...]   # (BT, C_MID)
    h = jnp.maximum(h, 0.0)
    s = jnp.dot(h, w2t_ref[...],
                preferred_element_type=jnp.float32) + b2_ref[...]   # (BT, C_IN)
    s = jax.nn.sigmoid(s)

    # Scale the input: per-(batch, channel) scale broadcast over L, one
    # lane-dense store of the whole tile.
    o_ref[...] = (xf * s[:, :, None]).astype(o_ref.dtype)


def squeeze_excitation2(x, w1, b1, w2, b2, *, bt=None):
    """x: (B, 256, L); w1: (64, 256); b1: (64, 1); w2: (256, 64); b2: (256, 1)."""
    B, C, L = x.shape
    assert C == C_IN, f"expected {C_IN} channels, got {C}"

    itemsize = jnp.dtype(x.dtype).itemsize
    if bt is None:
        # Target ~4 MiB per x tile (input + output double buffered ≈ 16 MiB),
        # which amortizes the ~0.35 us per-grid-step overhead while staying
        # well under the default scoped-VMEM limit on v5e/v6e/v7x.
        tile_budget_bytes = 4 * 1024 * 1024
        bt = max(1, tile_budget_bytes // (C * L * itemsize))
        bt = min(bt, B)
    grid_b = pl.cdiv(B, bt)

    # Pre-transpose weights / reshape biases for lane-dense (BT, C) matmuls.
    w1t = w1.T                      # (C_IN, C_MID)
    w2t = w2.T                      # (C_MID, C_IN)
    b1r = b1.reshape(1, C_MID)
    b2r = b2.reshape(1, C_IN)

    cost = pl.CostEstimate(
        flops=int(B * (2 * C * L + 4 * C_IN * C_MID)),
        transcendentals=int(B * C_IN),
        bytes_accessed=int(2 * B * C * L * itemsize),
    )

    return pl.pallas_call(
        se_kernel,
        out_shape=jax.ShapeDtypeStruct((B, C, L), x.dtype),
        grid_spec=pltpu.PrefetchScalarGridSpec(
            num_scalar_prefetch=0,
            grid=(grid_b,),
            in_specs=[
                pl.BlockSpec((bt, C_IN, L), lambda i: (i, 0, 0)),   # x slab
                pl.BlockSpec((C_IN, C_MID), lambda i: (0, 0)),      # w1.T (resident)
                pl.BlockSpec((1, C_MID), lambda i: (0, 0)),         # b1
                pl.BlockSpec((C_MID, C_IN), lambda i: (0, 0)),      # w2.T (resident)
                pl.BlockSpec((1, C_IN), lambda i: (0, 0)),          # b2
            ],
            out_specs=pl.BlockSpec((bt, C_IN, L), lambda i: (i, 0, 0)),
        ),
        compiler_params=pltpu.CompilerParams(
            dimension_semantics=("parallel",)),
        cost_estimate=cost,
    )(x, w1t, b1r, w2t, b2r)


def reference(x, w1, b1, w2, b2):
    pooled = jnp.mean(x, axis=-1, keepdims=True)            # (B, C, 1)
    h = jnp.einsum("oc,bcl->bol", w1, pooled) + b1[None, :, :]
    h = jnp.maximum(h, 0.0)
    s = jnp.einsum("oc,bcl->bol", w2, h) + b2[None, :, :]
    s = jax.nn.sigmoid(s)
    return s * x


if __name__ == "__main__":
    key = jax.random.PRNGKey(0)
    kx, k1, k2, k3, k4 = jax.random.split(key, 5)

    B, L = 2, 128
    x = jax.random.normal(kx, (B, C_IN, L), dtype=jnp.float32)

    # Deterministic parameter init (shapes from Conv1d(256,64,1) / Conv1d(64,256,1)).
    w1 = jax.random.normal(k1, (C_MID, C_IN), dtype=jnp.float32) * 0.05
    b1 = jax.random.normal(k2, (C_MID, 1), dtype=jnp.float32) * 0.05
    w2 = jax.random.normal(k3, (C_IN, C_MID), dtype=jnp.float32) * 0.05
    b2 = jax.random.normal(k4, (C_IN, 1), dtype=jnp.float32) * 0.05

    out = squeeze_excitation2(x, w1, b1, w2, b2)
    out = jax.block_until_ready(out)

    ref = reference(x, w1, b1, w2, b2)
    assert out.shape == x.shape
    assert jnp.allclose(out, ref, atol=1e-5, rtol=1e-5), "mismatch vs reference"

    print("KERNEL_OK")
</pallas_src>

<mosaic_0001>
module attributes {stable_mosaic.version = 11 : i64} {
  func.func @se_kernel(%arg0: i32, %arg1: memref<2x256x128xf32, #tpu.memory_space<vmem>>, %arg2: memref<256x64xf32, #tpu.memory_space<vmem>>, %arg3: memref<1x64xf32, #tpu.memory_space<vmem>>, %arg4: memref<64x256xf32, #tpu.memory_space<vmem>>, %arg5: memref<1x256xf32, #tpu.memory_space<vmem>>, %arg6: memref<2x256x128xf32, #tpu.memory_space<vmem>>) attributes {dimension_semantics = [#tpu.dimension_semantics<parallel>], iteration_bounds = array<i64: 1>, scalar_prefetch = 0 : i64, scratch_operands = 0 : i64, tpu.core_type = #tpu.core_type<tc>, window_params = [{transform_indices = @transform_0, window_bounds = array<i64: 2, 256, 128>}, {pipeline_mode = #tpu.pipeline_mode<synchronous>, transform_indices = @transform_1, window_bounds = array<i64: 256, 64>}, {pipeline_mode = #tpu.pipeline_mode<synchronous>, transform_indices = @transform_2, window_bounds = array<i64: 1, 64>}, {pipeline_mode = #tpu.pipeline_mode<synchronous>, transform_indices = @transform_3, window_bounds = array<i64: 64, 256>}, {pipeline_mode = #tpu.pipeline_mode<synchronous>, transform_indices = @transform_4, window_bounds = array<i64: 1, 256>}, {transform_indices = @transform_5, window_bounds = array<i64: 2, 256, 128>}]} {
    %c0 = arith.constant 0 : index
    %c0_0 = arith.constant 0 : index
    %c0_1 = arith.constant 0 : index
    %0 = vector.load %arg1[%c0, %c0_0, %c0_1] : memref<2x256x128xf32, #tpu.memory_space<vmem>>, vector<2x256x128xf32>
    %cst = arith.constant dense<0.000000e+00> : vector<2x256xf32>
    %1 = vector.multi_reduction <add>, %0, %cst [2] : vector<2x256x128xf32> to vector<2x256xf32>
    %cst_2 = arith.constant 1.280000e+02 : f32
    %2 = vector.broadcast %cst_2 : f32 to vector<2x256xf32>
    %3 = arith.divf %1, %2 : vector<2x256xf32>
    %c0_3 = arith.constant 0 : index
    %c0_4 = arith.constant 0 : index
    %4 = vector.load %arg2[%c0_3, %c0_4] : memref<256x64xf32, #tpu.memory_space<vmem>>, vector<256x64xf32>
    %cst_5 = arith.constant dense<0.000000e+00> : vector<2x64xf32>
    %5 = tpu.matmul %3, %4, %cst_5 {dimension_numbers = #tpu.dot_dimension_numbers<[1], [0], [0], [1], [0, 0, 1, 1], [], []>} : vector<2x256xf32>, vector<256x64xf32>, vector<2x64xf32> -> vector<2x64xf32>
    %c0_6 = arith.constant 0 : index
    %c0_7 = arith.constant 0 : index
    %6 = vector.load %arg3[%c0_6, %c0_7] : memref<1x64xf32, #tpu.memory_space<vmem>>, vector<1x64xf32>
    %7 = vector.broadcast %6 : vector<1x64xf32> to vector<2x64xf32>
    %8 = arith.addf %5, %7 : vector<2x64xf32>
    %cst_8 = arith.constant 0.000000e+00 : f32
    %9 = vector.broadcast %cst_8 : f32 to vector<2x64xf32>
    %10 = arith.maximumf %8, %9 : vector<2x64xf32>
    %c0_9 = arith.constant 0 : index
    %c0_10 = arith.constant 0 : index
    %11 = vector.load %arg4[%c0_9, %c0_10] : memref<64x256xf32, #tpu.memory_space<vmem>>, vector<64x256xf32>
    %cst_11 = arith.constant dense<0.000000e+00> : vector<2x256xf32>
    %12 = tpu.matmul %10, %11, %cst_11 {dimension_numbers = #tpu.dot_dimension_numbers<[1], [0], [0], [1], [0, 0, 1, 1], [], []>} : vector<2x64xf32>, vector<64x256xf32>, vector<2x256xf32> -> vector<2x256xf32>
    %c0_12 = arith.constant 0 : index
    %c0_13 = arith.constant 0 : index
    %13 = vector.load %arg5[%c0_12, %c0_13] : memref<1x256xf32, #tpu.memory_space<vmem>>, vector<1x256xf32>
    %14 = vector.broadcast %13 : vector<1x256xf32> to vector<2x256xf32>
    %15 = arith.addf %12, %14 : vector<2x256xf32>
    %16 = arith.negf %15 : vector<2x256xf32>
    %17 = math.exp %16 : vector<2x256xf32>
    %cst_14 = arith.constant 1.000000e+00 : f32
    %18 = vector.broadcast %cst_14 : f32 to vector<2x256xf32>
    %19 = arith.addf %18, %17 : vector<2x256xf32>
    %20 = arith.divf %18, %19 : vector<2x256xf32>
    %21 = vector.shape_cast %20 : vector<2x256xf32> to vector<2x256x1xf32>
    %22 = vector.broadcast %21 : vector<2x256x1xf32> to vector<2x256x128xf32>
    %23 = arith.mulf %0, %22 : vector<2x256x128xf32>
    %c0_15 = arith.constant 0 : index
    %c0_16 = arith.constant 0 : index
    %c0_17 = arith.constant 0 : index
    %24 = vector.load %arg6[%c0_15, %c0_16, %c0_17] : memref<2x256x128xf32, #tpu.memory_space<vmem>>, vector<2x256x128xf32>
    tpu.vector_store %arg6[%c0_15, %c0_16, %c0_17], %23 {strides = array<i32>} : memref<2x256x128xf32, #tpu.memory_space<vmem>>, vector<2x256x128xf32>,
    return
  }
  func.func @transform_0(%arg0: i32) -> (i32, i32, i32) {
    %c0_i32 = arith.constant 0 : i32
    %c0_i32_0 = arith.constant 0 : i32
    %c0_i32_1 = arith.constant 0 : i32
    return %arg0, %c0_i32, %c0_i32_0 : i32, i32, i32
  }
  func.func @transform_1(%arg0: i32) -> (i32, i32) {
    %c0_i32 = arith.constant 0 : i32
    %c0_i32_0 = arith.constant 0 : i32
    %c0_i32_1 = arith.constant 0 : i32
    return %c0_i32, %c0_i32_0 : i32, i32
  }
  func.func @transform_2(%arg0: i32) -> (i32, i32) {
    %c0_i32 = arith.constant 0 : i32
    %c0_i32_0 = arith.constant 0 : i32
    %c0_i32_1 = arith.constant 0 : i32
    return %c0_i32, %c0_i32_0 : i32, i32
  }
  func.func @transform_3(%arg0: i32) -> (i32, i32) {
    %c0_i32 = arith.constant 0 : i32
    %c0_i32_0 = arith.constant 0 : i32
    %c0_i32_1 = arith.constant 0 : i32
    return %c0_i32, %c0_i32_0 : i32, i32
  }
  func.func @transform_4(%arg0: i32) -> (i32, i32) {
    %c0_i32 = arith.constant 0 : i32
    %c0_i32_0 = arith.constant 0 : i32
    %c0_i32_1 = arith.constant 0 : i32
    return %c0_i32, %c0_i32_0 : i32, i32
  }
  func.func @transform_5(%arg0: i32) -> (i32, i32, i32) {
    %c0_i32 = arith.constant 0 : i32
    %c0_i32_0 = arith.constant 0 : i32
    %c0_i32_1 = arith.constant 0 : i32
    return %arg0, %c0_i32, %c0_i32_0 : i32, i32, i32
  }
}

</mosaic_0001>

<llo_original>
// kernel: tpu_custom_call.1
$region0: #{tpu_custom_call.1}
  #allocation0 [shape = 'u32[]', space=smem, size = 0x4, offset = 0x4, fixed_abs, tag = 'smem constant byte address 0x4 - core index']
  #allocation1 [shape = 'u32[144,128]{1,0:T(1,128)}', space=vmem, size = 0x12000, scoped, tag = 'internal scratch']
  %s0 = inlined_call_operand.hbm [shape: f32[2,256,128], index: 0, kind: input, shape index: {}]
  %s1 = inlined_call_operand.vmem [shape: f32[256,64], index: 1, kind: input, shape index: {}]
  %s2 = inlined_call_operand.vmem [shape: f32[1,64], index: 2, kind: input, shape index: {}]
  %s3 = inlined_call_operand.vmem [shape: f32[64,256], index: 3, kind: input, shape index: {}]
  %s4 = inlined_call_operand.vmem [shape: f32[1,256], index: 4, kind: input, shape index: {}]
  %s5 = inlined_call_operand.hbm [shape: f32[2,256,128], index: 5, kind: output, shape index: {}]
  %s6 = sld [smem:[#allocation0]]
  $region34: #{tpu_custom_call.1} parent=0
    _
  %s8 = ssub.s32 1, %s6
  %s9 = scalar_select 0, %s8, %s6
  $region1: #{tpu_custom_call.1} parent=0
    #allocation2 [shape = 'u8[262144]{0}', space=vmem, size = 0x40000, scoped, tag = 'input window, operand 0, single buffered']
    #allocation3 [shape = 's32[1]{0}', space=sflag, size = 0x4, scoped, tag = 'scoped memory for tpu_custom_call.1']
    #allocation4 [shape = 's32[1]{0}', space=sflag, size = 0x4, scoped, tag = 'scoped memory for tpu_custom_call.1']
    #allocation5 [shape = 'u8[262144]{0}', space=vmem, size = 0x40000, scoped, tag = 'output window, operand 0, single buffered']
    %10 = vsyncpa [#allocation3], 0
    %11 = vsyncpa [#allocation4], 0
    // Predicated region
    $region2: #{tpu_custom_call.1} parent=1 // pred_check
      _
    $region3: #{tpu_custom_call.1} parent=1 // pred_check_branch
      %13 = sbr.rel (0) target = $region5
    $region4: #{tpu_custom_call.1} parent=1 // pred_region
      %s15 = ssub.s32 8192, 8192
      %16 = vsyncadd [#allocation3], %s15
      %s17 = sshll.u32 [#allocation2], 4
      %s18 = int_to_ptr.vmem [resolvable:$true] %s17
      %23 = dma.hbm_to_vmem [thread:$0]  %s0, 8192, %s18, [#allocation3], 128, 128, 8
    $region5: #{tpu_custom_call.1} parent=1 // pred_fallthru
      _
    // Predicated region
    $region6: #{tpu_custom_call.1} parent=1 // pred_check
      _
    $region7: #{tpu_custom_call.1} parent=1 // pred_check_branch
      %25 = sbr.rel (0) target = $region9
    $region8: #{tpu_custom_call.1} parent=1 // pred_region
      _
    $region9: #{tpu_custom_call.1} parent=1 // pred_fallthru
      _
    // Predicated region
    $region10: #{tpu_custom_call.1} parent=1 // pred_check
      _
    $region11: #{tpu_custom_call.1} parent=1 // pred_check_branch
      %27 = sbr.rel (0) target = $region13
    $region12: #{tpu_custom_call.1} parent=1 // pred_region
      _
    $region13: #{tpu_custom_call.1} parent=1 // pred_fallthru
      _
    // Predicated region
    $region14: #{tpu_custom_call.1} parent=1 // pred_check
      _
    $region15: #{tpu_custom_call.1} parent=1 // pred_check_branch
      %29 = sbr.rel (0) target = $region17
    $region16: #{tpu_custom_call.1} parent=1 // pred_region
      _
    $region17: #{tpu_custom_call.1} parent=1 // pred_fallthru
      _
    // Predicated region
    $region18: #{tpu_custom_call.1} parent=1 // pred_check
      _
    $region19: #{tpu_custom_call.1} parent=1 // pred_check_branch
      %31 = sbr.rel (0) target = $region21
    $region20: #{tpu_custom_call.1} parent=1 // pred_region
      _
    $region21: #{tpu_custom_call.1} parent=1 // pred_fallthru
      _
    // Predicated region
    $region22: #{tpu_custom_call.1} parent=1 // pred_check
      _
    $region23: #{tpu_custom_call.1} parent=1 // pred_check_branch
      %33 = sbr.rel (0) target = $region25
    $region24: #{tpu_custom_call.1} parent=1 // pred_region
      %34 = dma.done [#allocation3], 8192
    $region25: #{tpu_custom_call.1} parent=1 // pred_fallthru
      _
    %v35 = vld [vmem:[#allocation2] sm:$0xff]
    %v36 = vld [vmem:[#allocation2 + $0x8] sm:$0xff]
    %v37 = vld [vmem:[#allocation2 + $0x10] sm:$0xff]
    %v38 = vld [vmem:[#allocation2 + $0x18] sm:$0xff]
    %v39 = vld [vmem:[#allocation2 + $0x20] sm:$0xff]
    %v40 = vld [vmem:[#allocation2 + $0x28] sm:$0xff]
    %v41 = vld [vmem:[#allocation2 + $0x30] sm:$0xff]
    %v42 = vld [vmem:[#allocation2 + $0x38] sm:$0xff]
    %v43 = vld [vmem:[#allocation2 + $0x40] sm:$0xff]
    %v44 = vld [vmem:[#allocation2 + $0x48] sm:$0xff]
    %v45 = vld [vmem:[#allocation2 + $0x50] sm:$0xff]
    %v46 = vld [vmem:[#allocation2 + $0x58] sm:$0xff]
    %v47 = vld [vmem:[#allocation2 + $0x60] sm:$0xff]
    %v48 = vld [vmem:[#allocation2 + $0x68] sm:$0xff]
    %v49 = vld [vmem:[#allocation2 + $0x70] sm:$0xff]
    %v50 = vld [vmem:[#allocation2 + $0x78] sm:$0xff]
    %v51 = vld [vmem:[#allocation2 + $0x80] sm:$0xff]
    %v52 = vld [vmem:[#allocation2 + $0x88] sm:$0xff]
    %v53 = vld [vmem:[#allocation2 + $0x90] sm:$0xff]
    %v54 = vld [vmem:[#allocation2 + $0x98] sm:$0xff]
    %v55 = vld [vmem:[#allocation2 + $0xa0] sm:$0xff]
    %v56 = vld [vmem:[#allocation2 + $0xa8] sm:$0xff]
    %v57 = vld [vmem:[#allocation2 + $0xb0] sm:$0xff]
    %v58 = vld [vmem:[#allocation2 + $0xb8] sm:$0xff]
    %v59 = vld [vmem:[#allocation2 + $0xc0] sm:$0xff]
    %v60 = vld [vmem:[#allocation2 + $0xc8] sm:$0xff]
    %v61 = vld [vmem:[#allocation2 + $0xd0] sm:$0xff]
    %v62 = vld [vmem:[#allocation2 + $0xd8] sm:$0xff]
    %v63 = vld [vmem:[#allocation2 + $0xe0] sm:$0xff]
    %v64 = vld [vmem:[#allocation2 + $0xe8] sm:$0xff]
    %v65 = vld [vmem:[#allocation2 + $0xf0] sm:$0xff]
    %v66 = vld [vmem:[#allocation2 + $0xf8] sm:$0xff]
    %v67 = vld [vmem:[#allocation2 + $0x100] sm:$0xff]
    %v68 = vld [vmem:[#allocation2 + $0x108] sm:$0xff]
    %v69 = vld [vmem:[#allocation2 + $0x110] sm:$0xff]
    %v70 = vld [vmem:[#allocation2 + $0x118] sm:$0xff]
    %v71 = vld [vmem:[#allocation2 + $0x120] sm:$0xff]
    %v72 = vld [vmem:[#allocation2 + $0x128] sm:$0xff]
    %v73 = vld [vmem:[#allocation2 + $0x130] sm:$0xff]
    %v74 = vld [vmem:[#allocation2 + $0x138] sm:$0xff]
    %v75 = vld [vmem:[#allocation2 + $0x140] sm:$0xff]
    %v76 = vld [vmem:[#allocation2 + $0x148] sm:$0xff]
    %v77 = vld [vmem:[#allocation2 + $0x150] sm:$0xff]
    %v78 = vld [vmem:[#allocation2 + $0x158] sm:$0xff]
    %v79 = vld [vmem:[#allocation2 + $0x160] sm:$0xff]
    %v80 = vld [vmem:[#allocation2 + $0x168] sm:$0xff]
    %v81 = vld [vmem:[#allocation2 + $0x170] sm:$0xff]
    %v82 = vld [vmem:[#allocation2 + $0x178] sm:$0xff]
    %v83 = vld [vmem:[#allocation2 + $0x180] sm:$0xff]
    %v84 = vld [vmem:[#allocation2 + $0x188] sm:$0xff]
    %v85 = vld [vmem:[#allocation2 + $0x190] sm:$0xff]
    %v86 = vld [vmem:[#allocation2 + $0x198] sm:$0xff]
    %v87 = vld [vmem:[#allocation2 + $0x1a0] sm:$0xff]
    %v88 = vld [vmem:[#allocation2 + $0x1a8] sm:$0xff]
    %v89 = vld [vmem:[#allocation2 + $0x1b0] sm:$0xff]
    %v90 = vld [vmem:[#allocation2 + $0x1b8] sm:$0xff]
    %v91 = vld [vmem:[#allocation2 + $0x1c0] sm:$0xff]
    %v92 = vld [vmem:[#allocation2 + $0x1c8] sm:$0xff]
    %v93 = vld [vmem:[#allocation2 + $0x1d0] sm:$0xff]
    %v94 = vld [vmem:[#allocation2 + $0x1d8] sm:$0xff]
    %v95 = vld [vmem:[#allocation2 + $0x1e0] sm:$0xff]
    %v96 = vld [vmem:[#allocation2 + $0x1e8] sm:$0xff]
    %v97 = vld [vmem:[#allocation2 + $0x1f0] sm:$0xff]
    %v98 = vld [vmem:[#allocation2 + $0x1f8] sm:$0xff]
    %99 = vadd.xlane.f32.xlu0 %v35
    %v100 = vpop.xlane.xlu0 %99
    %101 = vadd.xlane.f32.xlu0 %v36
    %v102 = vpop.xlane.xlu0 %101
    %103 = vadd.xlane.f32.xlu0 %v37
    %v104 = vpop.xlane.xlu0 %103
    %105 = vadd.xlane.f32.xlu0 %v38
    %v106 = vpop.xlane.xlu0 %105
    %107 = vadd.xlane.f32.xlu0 %v39
    %v108 = vpop.xlane.xlu0 %107
    %109 = vadd.xlane.f32.xlu0 %v40
    %v110 = vpop.xlane.xlu0 %109
    %111 = vadd.xlane.f32.xlu0 %v41
    %v112 = vpop.xlane.xlu0 %111
    %113 = vadd.xlane.f32.xlu0 %v42
    %v114 = vpop.xlane.xlu0 %113
    %115 = vadd.xlane.f32.xlu0 %v43
    %v116 = vpop.xlane.xlu0 %115
    %117 = vadd.xlane.f32.xlu0 %v44
    %v118 = vpop.xlane.xlu0 %117
    %119 = vadd.xlane.f32.xlu0 %v45
    %v120 = vpop.xlane.xlu0 %119
    %121 = vadd.xlane.f32.xlu0 %v46
    %v122 = vpop.xlane.xlu0 %121
    %123 = vadd.xlane.f32.xlu0 %v47
    %v124 = vpop.xlane.xlu0 %123
    %125 = vadd.xlane.f32.xlu0 %v48
    %v126 = vpop.xlane.xlu0 %125
    %127 = vadd.xlane.f32.xlu0 %v49
    %v128 = vpop.xlane.xlu0 %127
    %129 = vadd.xlane.f32.xlu0 %v50
    %v130 = vpop.xlane.xlu0 %129
    %131 = vadd.xlane.f32.xlu0 %v51
    %v132 = vpop.xlane.xlu0 %131
    %133 = vadd.xlane.f32.xlu0 %v52
    %v134 = vpop.xlane.xlu0 %133
    %135 = vadd.xlane.f32.xlu0 %v53
    %v136 = vpop.xlane.xlu0 %135
    %137 = vadd.xlane.f32.xlu0 %v54
    %v138 = vpop.xlane.xlu0 %137
    %139 = vadd.xlane.f32.xlu0 %v55
    %v140 = vpop.xlane.xlu0 %139
    %141 = vadd.xlane.f32.xlu0 %v56
    %v142 = vpop.xlane.xlu0 %141
    %143 = vadd.xlane.f32.xlu0 %v57
    %v144 = vpop.xlane.xlu0 %143
    %145 = vadd.xlane.f32.xlu0 %v58
    %v146 = vpop.xlane.xlu0 %145
    %147 = vadd.xlane.f32.xlu0 %v59
    %v148 = vpop.xlane.xlu0 %147
    %149 = vadd.xlane.f32.xlu0 %v60
    %v150 = vpop.xlane.xlu0 %149
    %151 = vadd.xlane.f32.xlu0 %v61
    %v152 = vpop.xlane.xlu0 %151
    %153 = vadd.xlane.f32.xlu0 %v62
    %v154 = vpop.xlane.xlu0 %153
    %155 = vadd.xlane.f32.xlu0 %v63
    %v156 = vpop.xlane.xlu0 %155
    %157 = vadd.xlane.f32.xlu0 %v64
    %v158 = vpop.xlane.xlu0 %157
    %159 = vadd.xlane.f32.xlu0 %v65
    %v160 = vpop.xlane.xlu0 %159
    %161 = vadd.xlane.f32.xlu0 %v66
    %v162 = vpop.xlane.xlu0 %161
    %163 = vadd.xlane.f32.xlu0 %v67
    %v164 = vpop.xlane.xlu0 %163
    %165 = vadd.xlane.f32.xlu0 %v68
    %v166 = vpop.xlane.xlu0 %165
    %167 = vadd.xlane.f32.xlu0 %v69
    %v168 = vpop.xlane.xlu0 %167
    %169 = vadd.xlane.f32.xlu0 %v70
    %v170 = vpop.xlane.xlu0 %169
    %171 = vadd.xlane.f32.xlu0 %v71
    %v172 = vpop.xlane.xlu0 %171
    %173 = vadd.xlane.f32.xlu0 %v72
    %v174 = vpop.xlane.xlu0 %173
    %175 = vadd.xlane.f32.xlu0 %v73
    %v176 = vpop.xlane.xlu0 %175
    %177 = vadd.xlane.f32.xlu0 %v74
    %v178 = vpop.xlane.xlu0 %177
    %179 = vadd.xlane.f32.xlu0 %v75
    %v180 = vpop.xlane.xlu0 %179
    %181 = vadd.xlane.f32.xlu0 %v76
    %v182 = vpop.xlane.xlu0 %181
    %183 = vadd.xlane.f32.xlu0 %v77
    %v184 = vpop.xlane.xlu0 %183
    %185 = vadd.xlane.f32.xlu0 %v78
    %v186 = vpop.xlane.xlu0 %185
    %187 = vadd.xlane.f32.xlu0 %v79
    %v188 = vpop.xlane.xlu0 %187
    %189 = vadd.xlane.f32.xlu0 %v80
    %v190 = vpop.xlane.xlu0 %189
    %191 = vadd.xlane.f32.xlu0 %v81
    %v192 = vpop.xlane.xlu0 %191
    %193 = vadd.xlane.f32.xlu0 %v82
    %v194 = vpop.xlane.xlu0 %193
    %195 = vadd.xlane.f32.xlu0 %v83
    %v196 = vpop.xlane.xlu0 %195
    %197 = vadd.xlane.f32.xlu0 %v84
    %v198 = vpop.xlane.xlu0 %197
    %199 = vadd.xlane.f32.xlu0 %v85
    %v200 = vpop.xlane.xlu0 %199
    %201 = vadd.xlane.f32.xlu0 %v86
    %v202 = vpop.xlane.xlu0 %201
    %203 = vadd.xlane.f32.xlu0 %v87
    %v204 = vpop.xlane.xlu0 %203
    %205 = vadd.xlane.f32.xlu0 %v88
    %v206 = vpop.xlane.xlu0 %205
    %207 = vadd.xlane.f32.xlu0 %v89
    %v208 = vpop.xlane.xlu0 %207
    %209 = vadd.xlane.f32.xlu0 %v90
    %v210 = vpop.xlane.xlu0 %209
    %211 = vadd.xlane.f32.xlu0 %v91
    %v212 = vpop.xlane.xlu0 %211
    %213 = vadd.xlane.f32.xlu0 %v92
    %v214 = vpop.xlane.xlu0 %213
    %215 = vadd.xlane.f32.xlu0 %v93
    %v216 = vpop.xlane.xlu0 %215
    %217 = vadd.xlane.f32.xlu0 %v94
    %v218 = vpop.xlane.xlu0 %217
    %219 = vadd.xlane.f32.xlu0 %v95
    %v220 = vpop.xlane.xlu0 %219
    %221 = vadd.xlane.f32.xlu0 %v96
    %v222 = vpop.xlane.xlu0 %221
    %223 = vadd.xlane.f32.xlu0 %v97
    %v224 = vpop.xlane.xlu0 %223
    %225 = vadd.xlane.f32.xlu0 %v98
    %v226 = vpop.xlane.xlu0 %225
    %v227 = vrcp.pop 128.0
    %v228 = vmul.f32 %v100, %v227
    %v229 = vmul.f32 %v102, %v227
    %v230 = vmul.f32 %v104, %v227
    %v231 = vmul.f32 %v106, %v227
    %v232 = vmul.f32 %v108, %v227
    %v233 = vmul.f32 %v110, %v227
    %v234 = vmul.f32 %v112, %v227
    %v235 = vmul.f32 %v114, %v227
    %v236 = vmul.f32 %v116, %v227
    %v237 = vmul.f32 %v118, %v227
    %v238 = vmul.f32 %v120, %v227
    %v239 = vmul.f32 %v122, %v227
    %v240 = vmul.f32 %v124, %v227
    %v241 = vmul.f32 %v126, %v227
    %v242 = vmul.f32 %v128, %v227
    %v243 = vmul.f32 %v130, %v227
    %v244 = vmul.f32 %v132, %v227
    %v245 = vmul.f32 %v134, %v227
    %v246 = vmul.f32 %v136, %v227
    %v247 = vmul.f32 %v138, %v227
    %v248 = vmul.f32 %v140, %v227
    %v249 = vmul.f32 %v142, %v227
    %v250 = vmul.f32 %v144, %v227
    %v251 = vmul.f32 %v146, %v227
    %v252 = vmul.f32 %v148, %v227
    %v253 = vmul.f32 %v150, %v227
    %v254 = vmul.f32 %v152, %v227
    %v255 = vmul.f32 %v154, %v227
    %v256 = vmul.f32 %v156, %v227
    %v257 = vmul.f32 %v158, %v227
    %v258 = vmul.f32 %v160, %v227
    %v259 = vmul.f32 %v162, %v227
    %v260 = vmul.f32 %v164, %v227
    %v261 = vmul.f32 %v166, %v227
    %v262 = vmul.f32 %v168, %v227
    %v263 = vmul.f32 %v170, %v227
    %v264 = vmul.f32 %v172, %v227
    %v265 = vmul.f32 %v174, %v227
    %v266 = vmul.f32 %v176, %v227
    %v267 = vmul.f32 %v178, %v227
    %v268 = vmul.f32 %v180, %v227
    %v269 = vmul.f32 %v182, %v227
    %v270 = vmul.f32 %v184, %v227
    %v271 = vmul.f32 %v186, %v227
    %v272 = vmul.f32 %v188, %v227
    %v273 = vmul.f32 %v190, %v227
    %v274 = vmul.f32 %v192, %v227
    %v275 = vmul.f32 %v194, %v227
    %v276 = vmul.f32 %v196, %v227
    %v277 = vmul.f32 %v198, %v227
    %v278 = vmul.f32 %v200, %v227
    %v279 = vmul.f32 %v202, %v227
    %v280 = vmul.f32 %v204, %v227
    %v281 = vmul.f32 %v206, %v227
    %v282 = vmul.f32 %v208, %v227
    %v283 = vmul.f32 %v210, %v227
    %v284 = vmul.f32 %v212, %v227
    %v285 = vmul.f32 %v214, %v227
    %v286 = vmul.f32 %v216, %v227
    %v287 = vmul.f32 %v218, %v227
    %v288 = vmul.f32 %v220, %v227
    %v289 = vmul.f32 %v222, %v227
    %v290 = vmul.f32 %v224, %v227
    %v291 = vmul.f32 %v226, %v227
    %v292 = vld [vmem:[%s1] sm:$0xff]
    %v293 = vld [vmem:[%s1 + $0x8] sm:$0xff]
    %v294 = vld [vmem:[%s1 + $0x10] sm:$0xff]
    %v295 = vld [vmem:[%s1 + $0x18] sm:$0xff]
    %v296 = vld [vmem:[%s1 + $0x20] sm:$0xff]
    %v297 = vld [vmem:[%s1 + $0x28] sm:$0xff]
    %v298 = vld [vmem:[%s1 + $0x30] sm:$0xff]
    %v299 = vld [vmem:[%s1 + $0x38] sm:$0xff]
    %v300 = vld [vmem:[%s1 + $0x40] sm:$0xff]
    %v301 = vld [vmem:[%s1 + $0x48] sm:$0xff]
    %v302 = vld [vmem:[%s1 + $0x50] sm:$0xff]
    %v303 = vld [vmem:[%s1 + $0x58] sm:$0xff]
    %v304 = vld [vmem:[%s1 + $0x60] sm:$0xff]
    %v305 = vld [vmem:[%s1 + $0x68] sm:$0xff]
    %v306 = vld [vmem:[%s1 + $0x70] sm:$0xff]
    %v307 = vld [vmem:[%s1 + $0x78] sm:$0xff]
    %v308 = vld [vmem:[%s1 + $0x80] sm:$0xff]
    %v309 = vld [vmem:[%s1 + $0x88] sm:$0xff]
    %v310 = vld [vmem:[%s1 + $0x90] sm:$0xff]
    %v311 = vld [vmem:[%s1 + $0x98] sm:$0xff]
    %v312 = vld [vmem:[%s1 + $0xa0] sm:$0xff]
    %v313 = vld [vmem:[%s1 + $0xa8] sm:$0xff]
    %v314 = vld [vmem:[%s1 + $0xb0] sm:$0xff]
    %v315 = vld [vmem:[%s1 + $0xb8] sm:$0xff]
    %v316 = vld [vmem:[%s1 + $0xc0] sm:$0xff]
    %v317 = vld [vmem:[%s1 + $0xc8] sm:$0xff]
    %v318 = vld [vmem:[%s1 + $0xd0] sm:$0xff]
    %v319 = vld [vmem:[%s1 + $0xd8] sm:$0xff]
    %v320 = vld [vmem:[%s1 + $0xe0] sm:$0xff]
    %v321 = vld [vmem:[%s1 + $0xe8] sm:$0xff]
    %v322 = vld [vmem:[%s1 + $0xf0] sm:$0xff]
    %v323 = vld [vmem:[%s1 + $0xf8] sm:$0xff]
    %v324 = vld [vmem:[%s2] sm:$0x1]
    %v326 = vlaneseq
    %v327 = vshrl.u32 %v326, 7
    %v328 = vsub.s32 0, %v327
    %v329 = vrot.slane %v324, %v328
    %v395 = vlaneseq
    %v396 = vand.u32 %v395, 127
    %v397 = vlaneseq
    %v398 = vshrl.u32 %v397, 7
    %v399 = vsub.s32 %v396, %v398
    %v400 = vrot.slane %v228, %v399
    %v401 = vadd.s32 %v396, 4294967288
    %v402 = vlaneseq
    %v403 = vshrl.u32 %v402, 7
    %v404 = vsub.s32 %v401, %v403
    %v405 = vrot.slane %v229, %v404
    %vm406 = vcmask 130112
    %v407 = vsel %vm406, %v405, %v400
    %v408 = vadd.s32 %v396, 4294967280
    %v409 = vlaneseq
    %v410 = vshrl.u32 %v409, 7
    %v411 = vsub.s32 %v408, %v410
    %v412 = vrot.slane %v230, %v411
    %vm413 = vcmask 195712
    %v414 = vsel %vm413, %v412, %v407
    %v415 = vadd.s32 %v396, 4294967272
    %v416 = vlaneseq
    %v417 = vshrl.u32 %v416, 7
    %v418 = vsub.s32 %v415, %v417
    %v419 = vrot.slane %v231, %v418
    %vm420 = vcmask 261312
    %v421 = vsel %vm420, %v419, %v414
    %v422 = vadd.s32 %v396, 4294967264
    %v423 = vlaneseq
    %v424 = vshrl.u32 %v423, 7
    %v425 = vsub.s32 %v422, %v424
    %v426 = vrot.slane %v232, %v425
    %vm427 = vcmask 326912
    %v428 = vsel %vm427, %v426, %v421
    %v429 = vadd.s32 %v396, 4294967256
    %v430 = vlaneseq
    %v431 = vshrl.u32 %v430, 7
    %v432 = vsub.s32 %v429, %v431
    %v433 = vrot.slane %v233, %v432
    %vm434 = vcmask 392512
    %v435 = vsel %vm434, %v433, %v428
    %v436 = vadd.s32 %v396, 4294967248
    %v437 = vlaneseq
    %v438 = vshrl.u32 %v437, 7
    %v439 = vsub.s32 %v436, %v438
    %v440 = vrot.slane %v234, %v439
    %vm441 = vcmask 458112
    %v442 = vsel %vm441, %v440, %v435
    %v443 = vadd.s32 %v396, 4294967240
    %v444 = vlaneseq
    %v445 = vshrl.u32 %v444, 7
    %v446 = vsub.s32 %v443, %v445
    %v447 = vrot.slane %v235, %v446
    %vm448 = vcmask 523712
    %v449 = vsel %vm448, %v447, %v442
    %v450 = vadd.s32 %v396, 4294967232
    %v451 = vlaneseq
    %v452 = vshrl.u32 %v451, 7
    %v453 = vsub.s32 %v450, %v452
    %v454 = vrot.slane %v236, %v453
    %vm455 = vcmask 589312
    %v456 = vsel %vm455, %v454, %v449
    %v457 = vadd.s32 %v396, 4294967224
    %v458 = vlaneseq
    %v459 = vshrl.u32 %v458, 7
    %v460 = vsub.s32 %v457, %v459
    %v461 = vrot.slane %v237, %v460
    %vm462 = vcmask 654912
    %v463 = vsel %vm462, %v461, %v456
    %v464 = vadd.s32 %v396, 4294967216
    %v465 = vlaneseq
    %v466 = vshrl.u32 %v465, 7
    %v467 = vsub.s32 %v464, %v466
    %v468 = vrot.slane %v238, %v467
    %vm469 = vcmask 720512
    %v470 = vsel %vm469, %v468, %v463
    %v471 = vadd.s32 %v396, 4294967208
    %v472 = vlaneseq
    %v473 = vshrl.u32 %v472, 7
    %v474 = vsub.s32 %v471, %v473
    %v475 = vrot.slane %v239, %v474
    %vm476 = vcmask 786112
    %v477 = vsel %vm476, %v475, %v470
    %v478 = vadd.s32 %v396, 4294967200
    %v479 = vlaneseq
    %v480 = vshrl.u32 %v479, 7
    %v481 = vsub.s32 %v478, %v480
    %v482 = vrot.slane %v240, %v481
    %vm483 = vcmask 851712
    %v484 = vsel %vm483, %v482, %v477
    %v485 = vadd.s32 %v396, 4294967192
    %v486 = vlaneseq
    %v487 = vshrl.u32 %v486, 7
    %v488 = vsub.s32 %v485, %v487
    %v489 = vrot.slane %v241, %v488
    %vm490 = vcmask 917312
    %v491 = vsel %vm490, %v489, %v484
    %v492 = vadd.s32 %v396, 4294967184
    %v493 = vlaneseq
    %v494 = vshrl.u32 %v493, 7
    %v495 = vsub.s32 %v492, %v494
    %v496 = vrot.slane %v242, %v495
    %vm497 = vcmask 982912
    %v498 = vsel %vm497, %v496, %v491
    %v499 = vadd.s32 %v396, 4294967176
    %v500 = vlaneseq
    %v501 = vshrl.u32 %v500, 7
    %v502 = vsub.s32 %v499, %v501
    %v503 = vrot.slane %v243, %v502
    %vm504 = vcmask 1048512
    %v505 = vsel %vm504, %v503, %v498
    %v506 = vlaneseq
    %v507 = vshrl.u32 %v506, 7
    %v508 = vsub.s32 %v396, %v507
    %v509 = vrot.slane %v244, %v508
    %v510 = vlaneseq
    %v511 = vshrl.u32 %v510, 7
    %v512 = vsub.s32 %v401, %v511
    %v513 = vrot.slane %v245, %v512
    %v514 = vsel %vm406, %v513, %v509
    %v515 = vlaneseq
    %v516 = vshrl.u32 %v515, 7
    %v517 = vsub.s32 %v408, %v516
    %v518 = vrot.slane %v246, %v517
    %v519 = vsel %vm413, %v518, %v514
    %v520 = vlaneseq
    %v521 = vshrl.u32 %v520, 7
    %v522 = vsub.s32 %v415, %v521
    %v523 = vrot.slane %v247, %v522
    %v524 = vsel %vm420, %v523, %v519
    %v525 = vlaneseq
    %v526 = vshrl.u32 %v525, 7
    %v527 = vsub.s32 %v422, %v526
    %v528 = vrot.slane %v248, %v527
    %v529 = vsel %vm427, %v528, %v524
    %v530 = vlaneseq
    %v531 = vshrl.u32 %v530, 7
    %v532 = vsub.s32 %v429, %v531
    %v533 = vrot.slane %v249, %v532
    %v534 = vsel %vm434, %v533, %v529
    %v535 = vlaneseq
    %v536 = vshrl.u32 %v535, 7
    %v537 = vsub.s32 %v436, %v536
    %v538 = vrot.slane %v250, %v537
    %v539 = vsel %vm441, %v538, %v534
    %v540 = vlaneseq
    %v541 = vshrl.u32 %v540, 7
    %v542 = vsub.s32 %v443, %v541
    %v543 = vrot.slane %v251, %v542
    %v544 = vsel %vm448, %v543, %v539
    %v545 = vlaneseq
    %v546 = vshrl.u32 %v545, 7
    %v547 = vsub.s32 %v450, %v546
    %v548 = vrot.slane %v252, %v547
    %v549 = vsel %vm455, %v548, %v544
    %v550 = vlaneseq
    %v551 = vshrl.u32 %v550, 7
    %v552 = vsub.s32 %v457, %v551
    %v553 = vrot.slane %v253, %v552
    %v554 = vsel %vm462, %v553, %v549
    %v555 = vlaneseq
    %v556 = vshrl.u32 %v555, 7
    %v557 = vsub.s32 %v464, %v556
    %v558 = vrot.slane %v254, %v557
    %v559 = vsel %vm469, %v558, %v554
    %v560 = vlaneseq
    %v561 = vshrl.u32 %v560, 7
    %v562 = vsub.s32 %v471, %v561
    %v563 = vrot.slane %v255, %v562
    %v564 = vsel %vm476, %v563, %v559
    %v565 = vlaneseq
    %v566 = vshrl.u32 %v565, 7
    %v567 = vsub.s32 %v478, %v566
    %v568 = vrot.slane %v256, %v567
    %v569 = vsel %vm483, %v568, %v564
    %v570 = vlaneseq
    %v571 = vshrl.u32 %v570, 7
    %v572 = vsub.s32 %v485, %v571
    %v573 = vrot.slane %v257, %v572
    %v574 = vsel %vm490, %v573, %v569
    %v575 = vlaneseq
    %v576 = vshrl.u32 %v575, 7
    %v577 = vsub.s32 %v492, %v576
    %v578 = vrot.slane %v258, %v577
    %v579 = vsel %vm497, %v578, %v574
    %v580 = vlaneseq
    %v581 = vshrl.u32 %v580, 7
    %v582 = vsub.s32 %v499, %v581
    %v583 = vrot.slane %v259, %v582
    %v584 = vsel %vm504, %v583, %v579
    %v585 = vlaneseq
    %v586 = vshrl.u32 %v585, 7
    %v587 = vsub.s32 %v396, %v586
    %v588 = vrot.slane %v260, %v587
    %v589 = vlaneseq
    %v590 = vshrl.u32 %v589, 7
    %v591 = vsub.s32 %v401, %v590
    %v592 = vrot.slane %v261, %v591
    %v593 = vsel %vm406, %v592, %v588
    %v594 = vlaneseq
    %v595 = vshrl.u32 %v594, 7
    %v596 = vsub.s32 %v408, %v595
    %v597 = vrot.slane %v262, %v596
    %v598 = vsel %vm413, %v597, %v593
    %v599 = vlaneseq
    %v600 = vshrl.u32 %v599, 7
    %v601 = vsub.s32 %v415, %v600
    %v602 = vrot.slane %v263, %v601
    %v603 = vsel %vm420, %v602, %v598
    %v604 = vlaneseq
    %v605 = vshrl.u32 %v604, 7
    %v606 = vsub.s32 %v422, %v605
    %v607 = vrot.slane %v264, %v606
    %v608 = vsel %vm427, %v607, %v603
    %v609 = vlaneseq
    %v610 = vshrl.u32 %v609, 7
    %v611 = vsub.s32 %v429, %v610
    %v612 = vrot.slane %v265, %v611
    %v613 = vsel %vm434, %v612, %v608
    %v614 = vlaneseq
    %v615 = vshrl.u32 %v614, 7
    %v616 = vsub.s32 %v436, %v615
    %v617 = vrot.slane %v266, %v616
    %v618 = vsel %vm441, %v617, %v613
    %v619 = vlaneseq
    %v620 = vshrl.u32 %v619, 7
    %v621 = vsub.s32 %v443, %v620
    %v622 = vrot.slane %v267, %v621
    %v623 = vsel %vm448, %v622, %v618
    %v624 = vlaneseq
    %v625 = vshrl.u32 %v624, 7
    %v626 = vsub.s32 %v450, %v625
    %v627 = vrot.slane %v268, %v626
    %v628 = vsel %vm455, %v627, %v623
    %v629 = vlaneseq
    %v630 = vshrl.u32 %v629, 7
    %v631 = vsub.s32 %v457, %v630
    %v632 = vrot.slane %v269, %v631
    %v633 = vsel %vm462, %v632, %v628
    %v634 = vlaneseq
    %v635 = vshrl.u32 %v634, 7
    %v636 = vsub.s32 %v464, %v635
    %v637 = vrot.slane %v270, %v636
    %v638 = vsel %vm469, %v637, %v633
    %v639 = vlaneseq
    %v640 = vshrl.u32 %v639, 7
    %v641 = vsub.s32 %v471, %v640
    %v642 = vrot.slane %v271, %v641
    %v643 = vsel %vm476, %v642, %v638
    %v644 = vlaneseq
    %v645 = vshrl.u32 %v644, 7
    %v646 = vsub.s32 %v478, %v645
    %v647 = vrot.slane %v272, %v646
    %v648 = vsel %vm483, %v647, %v643
    %v649 = vlaneseq
    %v650 = vshrl.u32 %v649, 7
    %v651 = vsub.s32 %v485, %v650
    %v652 = vrot.slane %v273, %v651
    %v653 = vsel %vm490, %v652, %v648
    %v654 = vlaneseq
    %v655 = vshrl.u32 %v654, 7
    %v656 = vsub.s32 %v492, %v655
    %v657 = vrot.slane %v274, %v656
    %v658 = vsel %vm497, %v657, %v653
    %v659 = vlaneseq
    %v660 = vshrl.u32 %v659, 7
    %v661 = vsub.s32 %v499, %v660
    %v662 = vrot.slane %v275, %v661
    %v663 = vsel %vm504, %v662, %v658
    %v664 = vlaneseq
    %v665 = vshrl.u32 %v664, 7
    %v666 = vsub.s32 %v396, %v665
    %v667 = vrot.slane %v276, %v666
    %v668 = vlaneseq
    %v669 = vshrl.u32 %v668, 7
    %v670 = vsub.s32 %v401, %v669
    %v671 = vrot.slane %v277, %v670
    %v672 = vsel %vm406, %v671, %v667
    %v673 = vlaneseq
    %v674 = vshrl.u32 %v673, 7
    %v675 = vsub.s32 %v408, %v674
    %v676 = vrot.slane %v278, %v675
    %v677 = vsel %vm413, %v676, %v672
    %v678 = vlaneseq
    %v679 = vshrl.u32 %v678, 7
    %v680 = vsub.s32 %v415, %v679
    %v681 = vrot.slane %v279, %v680
    %v682 = vsel %vm420, %v681, %v677
    %v683 = vlaneseq
    %v684 = vshrl.u32 %v683, 7
    %v685 = vsub.s32 %v422, %v684
    %v686 = vrot.slane %v280, %v685
    %v687 = vsel %vm427, %v686, %v682
    %v688 = vlaneseq
    %v689 = vshrl.u32 %v688, 7
    %v690 = vsub.s32 %v429, %v689
    %v691 = vrot.slane %v281, %v690
    %v692 = vsel %vm434, %v691, %v687
    %v693 = vlaneseq
    %v694 = vshrl.u32 %v693, 7
    %v695 = vsub.s32 %v436, %v694
    %v696 = vrot.slane %v282, %v695
    %v697 = vsel %vm441, %v696, %v692
    %v698 = vlaneseq
    %v699 = vshrl.u32 %v698, 7
    %v700 = vsub.s32 %v443, %v699
    %v701 = vrot.slane %v283, %v700
    %v702 = vsel %vm448, %v701, %v697
    %v703 = vlaneseq
    %v704 = vshrl.u32 %v703, 7
    %v705 = vsub.s32 %v450, %v704
    %v706 = vrot.slane %v284, %v705
    %v707 = vsel %vm455, %v706, %v702
    %v708 = vlaneseq
    %v709 = vshrl.u32 %v708, 7
    %v710 = vsub.s32 %v457, %v709
    %v711 = vrot.slane %v285, %v710
    %v712 = vsel %vm462, %v711, %v707
    %v713 = vlaneseq
    %v714 = vshrl.u32 %v713, 7
    %v715 = vsub.s32 %v464, %v714
    %v716 = vrot.slane %v286, %v715
    %v717 = vsel %vm469, %v716, %v712
    %v718 = vlaneseq
    %v719 = vshrl.u32 %v718, 7
    %v720 = vsub.s32 %v471, %v719
    %v721 = vrot.slane %v287, %v720
    %v722 = vsel %vm476, %v721, %v717
    %v723 = vlaneseq
    %v724 = vshrl.u32 %v723, 7
    %v725 = vsub.s32 %v478, %v724
    %v726 = vrot.slane %v288, %v725
    %v727 = vsel %vm483, %v726, %v722
    %v728 = vlaneseq
    %v729 = vshrl.u32 %v728, 7
    %v730 = vsub.s32 %v485, %v729
    %v731 = vrot.slane %v289, %v730
    %v732 = vsel %vm490, %v731, %v727
    %v733 = vlaneseq
    %v734 = vshrl.u32 %v733, 7
    %v735 = vsub.s32 %v492, %v734
    %v736 = vrot.slane %v290, %v735
    %v737 = vsel %vm497, %v736, %v732
    %v738 = vlaneseq
    %v739 = vshrl.u32 %v738, 7
    %v740 = vsub.s32 %v499, %v739
    %v741 = vrot.slane %v291, %v740
    %v742 = vsel %vm504, %v741, %v737
    %vm743 = vcmask 1041409
    %v744 = vsel %vm743, %v663, %v505
    %v745 = vsel %vm743, %v742, %v584
    %748 = vmatprep.subr.mxu0 0.0
    %749 = vmatpush1.msra.mxu0 %v292
    %750 = vmatprep.subr.mxu0 0.0
    %751 = vmatpush1.msra.mxu0 %v293
    %752 = vmatprep.subr.mxu0 0.0
    %753 = vmatpush1.msra.mxu0 %v294
    %754 = vmatprep.subr.mxu0 0.0
    %755 = vmatpush1.msra.mxu0 %v295
    %756 = vmatprep.subr.mxu0 0.0
    %757 = vmatpush1.msra.mxu0 %v296
    %758 = vmatprep.subr.mxu0 0.0
    %759 = vmatpush1.msra.mxu0 %v297
    %760 = vmatprep.subr.mxu0 0.0
    %761 = vmatpush1.msra.mxu0 %v298
    %762 = vmatprep.subr.mxu0 0.0
    %763 = vmatpush1.msra.mxu0 %v299
    %764 = vmatprep.subr.mxu0 0.0
    %765 = vmatpush1.msra.mxu0 %v300
    %766 = vmatprep.subr.mxu0 0.0
    %767 = vmatpush1.msra.mxu0 %v301
    %768 = vmatprep.subr.mxu0 0.0
    %769 = vmatpush1.msra.mxu0 %v302
    %770 = vmatprep.subr.mxu0 0.0
    %771 = vmatpush1.msra.mxu0 %v303
    %772 = vmatprep.subr.mxu0 0.0
    %773 = vmatpush1.msra.mxu0 %v304
    %774 = vmatprep.subr.mxu0 0.0
    %775 = vmatpush1.msra.mxu0 %v305
    %776 = vmatprep.subr.mxu0 0.0
    %777 = vmatpush1.msra.mxu0 %v306
    %778 = vmatprep.subr.mxu0 0.0
    %779 = vmatpush1.msra.mxu0 %v307
    %780 = vmatprep.subr.mxu0 0.0
    %781 = vmatpush1.msra.mxu0 %v308
    %782 = vmatprep.subr.mxu0 0.0
    %783 = vmatpush1.msra.mxu0 %v309
    %784 = vmatprep.subr.mxu0 0.0
    %785 = vmatpush1.msra.mxu0 %v310
    %786 = vmatprep.subr.mxu0 0.0
    %787 = vmatpush1.msra.mxu0 %v311
    %788 = vmatprep.subr.mxu0 0.0
    %789 = vmatpush1.msra.mxu0 %v312
    %790 = vmatprep.subr.mxu0 0.0
    %791 = vmatpush1.msra.mxu0 %v313
    %792 = vmatprep.subr.mxu0 0.0
    %793 = vmatpush1.msra.mxu0 %v314
    %794 = vmatprep.subr.mxu0 0.0
    %795 = vmatpush1.msra.mxu0 %v315
    %796 = vmatprep.subr.mxu0 0.0
    %797 = vmatpush1.msra.mxu0 %v316
    %798 = vmatprep.subr.mxu0 0.0
    %799 = vmatpush1.msra.mxu0 %v317
    %800 = vmatprep.subr.mxu0 0.0
    %801 = vmatpush1.msra.mxu0 %v318
    %802 = vmatprep.subr.mxu0 0.0
    %803 = vmatpush1.msra.mxu0 %v319
    %804 = vmatprep.subr.mxu0 0.0
    %805 = vmatpush1.msra.mxu0 %v320
    %806 = vmatprep.subr.mxu0 0.0
    %807 = vmatpush1.msra.mxu0 %v321
    %808 = vmatprep.subr.mxu0 0.0
    %809 = vmatpush1.msra.mxu0 %v322
    %810 = vmatprep.subr.mxu0 0.0
    %811 = vmatpush1.msra.mxu0 %v323
    %812 = vmatprep.mubr.f32.mxu0 %v745
    %813 = vmatmul.mubr.f32.gmra.mrb[0].mxu0 %v744
    %v814 = vpop.f32.mrb[0].mxu0
    %v815 = vadd.f32 %v329, %v814
    %v816 = vpop.f32.mrb[0].mxu0
    %817 = vdwg.mxu0
    %v818 = vmax.f32 %v815, 0.0
    %v819 = vld [vmem:[%s3] sm:$0xff]
    %v820 = vld [vmem:[%s3 + $0x8] sm:$0xff]
    %v821 = vld [vmem:[%s3 + $0x10] sm:$0xff]
    %v822 = vld [vmem:[%s3 + $0x18] sm:$0xff]
    %v823 = vld [vmem:[%s3 + $0x20] sm:$0xff]
    %v824 = vld [vmem:[%s3 + $0x28] sm:$0xff]
    %v825 = vld [vmem:[%s3 + $0x30] sm:$0xff]
    %v826 = vld [vmem:[%s3 + $0x38] sm:$0xff]
    %v827 = vld [vmem:[%s3 + $0x40] sm:$0xff]
    %v828 = vld [vmem:[%s3 + $0x48] sm:$0xff]
    %v829 = vld [vmem:[%s3 + $0x50] sm:$0xff]
    %v830 = vld [vmem:[%s3 + $0x58] sm:$0xff]
    %v831 = vld [vmem:[%s3 + $0x60] sm:$0xff]
    %v832 = vld [vmem:[%s3 + $0x68] sm:$0xff]
    %v833 = vld [vmem:[%s3 + $0x70] sm:$0xff]
    %v834 = vld [vmem:[%s3 + $0x78] sm:$0xff]
    %v835 = vld [vmem:[%s4] sm:$0x3]
    %v837 = vlaneseq
    %v838 = vshrl.u32 %v837, 7
    %v839 = vsub.s32 0, %v838
    %v840 = vrot.slane %v835, %v839
    %v841 = vlaneseq
    %v842 = vshrl.u32 %v841, 7
    %v843 = vsub.s32 1, %v842
    %v844 = vrot.slane %v835, %v843
    %vm847 = vcmask 523264
    %v849 = vsel %vm847, %v818, 0
    %851 = vmatprep.subr.mxu0 %v820
    %852 = vmatpush1.msra.mxu0 %v819
    %853 = vmatprep.subr.mxu0 %v822
    %854 = vmatpush1.msra.mxu0 %v821
    %855 = vmatprep.subr.mxu0 %v824
    %856 = vmatpush1.msra.mxu0 %v823
    %857 = vmatprep.subr.mxu0 %v826
    %858 = vmatpush1.msra.mxu0 %v825
    %859 = vmatprep.subr.mxu0 %v828
    %860 = vmatpush1.msra.mxu0 %v827
    %861 = vmatprep.subr.mxu0 %v830
    %862 = vmatpush1.msra.mxu0 %v829
    %863 = vmatprep.subr.mxu0 %v832
    %864 = vmatpush1.msra.mxu0 %v831
    %865 = vmatprep.subr.mxu0 %v834
    %866 = vmatpush1.msra.mxu0 %v833
    %867 = vmatprep.subr.mxu0 0.0
    %868 = vmatpush1.msra.mxu0 0.0
    %869 = vmatprep.subr.mxu0 0.0
    %870 = vmatpush1.msra.mxu0 0.0
    %871 = vmatprep.subr.mxu0 0.0
    %872 = vmatpush1.msra.mxu0 0.0
    %873 = vmatprep.subr.mxu0 0.0
    %874 = vmatpush1.msra.mxu0 0.0
    %875 = vmatprep.subr.mxu0 0.0
    %876 = vmatpush1.msra.mxu0 0.0
    %877 = vmatprep.subr.mxu0 0.0
    %878 = vmatpush1.msra.mxu0 0.0
    %879 = vmatprep.subr.mxu0 0.0
    %880 = vmatpush1.msra.mxu0 0.0
    %881 = vmatprep.subr.mxu0 0.0
    %882 = vmatpush1.msra.mxu0 0.0
    %883 = vmatprep.subr.mxu0 0.0
    %884 = vmatpush1.msra.mxu0 0.0
    %885 = vmatprep.subr.mxu0 0.0
    %886 = vmatpush1.msra.mxu0 0.0
    %887 = vmatprep.subr.mxu0 0.0
    %888 = vmatpush1.msra.mxu0 0.0
    %889 = vmatprep.subr.mxu0 0.0
    %890 = vmatpush1.msra.mxu0 0.0
    %891 = vmatprep.subr.mxu0 0.0
    %892 = vmatpush1.msra.mxu0 0.0
    %893 = vmatprep.subr.mxu0 0.0
    %894 = vmatpush1.msra.mxu0 0.0
    %895 = vmatprep.subr.mxu0 0.0
    %896 = vmatpush1.msra.mxu0 0.0
    %897 = vmatprep.subr.mxu0 0.0
    %898 = vmatpush1.msra.mxu0 0.0
    %899 = vmatprep.subr.mxu0 0.0
    %900 = vmatpush1.msra.mxu0 0.0
    %901 = vmatprep.subr.mxu0 0.0
    %902 = vmatpush1.msra.mxu0 0.0
    %903 = vmatprep.subr.mxu0 0.0
    %904 = vmatpush1.msra.mxu0 0.0
    %905 = vmatprep.subr.mxu0 0.0
    %906 = vmatpush1.msra.mxu0 0.0
    %907 = vmatprep.subr.mxu0 0.0
    %908 = vmatpush1.msra.mxu0 0.0
    %909 = vmatprep.subr.mxu0 0.0
    %910 = vmatpush1.msra.mxu0 0.0
    %911 = vmatprep.subr.mxu0 0.0
    %912 = vmatpush1.msra.mxu0 0.0
    %913 = vmatprep.subr.mxu0 0.0
    %914 = vmatpush1.msra.mxu0 0.0
    %915 = vmatprep.mubr.f32.mxu0 0.0
    %916 = vmatmul.mubr.f32.gmra.mrb[0].mxu0 %v849
    %v917 = vpop.f32.mrb[0].mxu0
    %v918 = vadd.f32 %v840, %v917
    %v919 = vpop.f32.mrb[0].mxu0
    %v920 = vadd.f32 %v844, %v919
    %921 = vdwg.mxu0
    %v922 = vxor.u32 %v918, 2147483648
    %v923 = vxor.u32 %v920, 2147483648
    %v924 = vmul.f32 %v922, 1.442695
    %v925 = vpow.pop %v924
    %v926 = vmul.f32 %v923, 1.442695
    %v927 = vpow.pop %v926
    %v928 = vadd.f32 %v925, 1.0
    %v929 = vadd.f32 %v927, 1.0
    %v930 = vrcp.pop %v928
    %v931 = vmul.f32 1.0, %v930
    %v932 = vrcp.pop %v929
    %v933 = vmul.f32 1.0, %v932
    %v934 = vlaneseq
    %v935 = vshrl.u32 %v934, 7
    %v936 = vsub.s32 0, %v935
    %v937 = vrot.slane %v931, %v936
    %939 = vbcast.lane.b32.xlu0 %v937, 256
    %v940 = vpop.permute.xlu0 %939
    %s942 = sor.u32 256, 8
    %943 = vbcast.lane.b32.xlu0 %v937, %s942
    %v944 = vpop.permute.xlu0 %943
    %s946 = sor.u32 256, 16
    %947 = vbcast.lane.b32.xlu0 %v937, %s946
    %v948 = vpop.permute.xlu0 %947
    %s950 = sor.u32 256, 24
    %951 = vbcast.lane.b32.xlu0 %v937, %s950
    %v952 = vpop.permute.xlu0 %951
    %s954 = sor.u32 256, 32
    %955 = vbcast.lane.b32.xlu0 %v937, %s954
    %v956 = vpop.permute.xlu0 %955
    %s958 = sor.u32 256, 40
    %959 = vbcast.lane.b32.xlu0 %v937, %s958
    %v960 = vpop.permute.xlu0 %959
    %s962 = sor.u32 256, 48
    %963 = vbcast.lane.b32.xlu0 %v937, %s962
    %v964 = vpop.permute.xlu0 %963
    %s966 = sor.u32 256, 56
    %967 = vbcast.lane.b32.xlu0 %v937, %s966
    %v968 = vpop.permute.xlu0 %967
    %s970 = sor.u32 256, 64
    %971 = vbcast.lane.b32.xlu0 %v937, %s970
    %v972 = vpop.permute.xlu0 %971
    %s974 = sor.u32 256, 72
    %975 = vbcast.lane.b32.xlu0 %v937, %s974
    %v976 = vpop.permute.xlu0 %975
    %s978 = sor.u32 256, 80
    %979 = vbcast.lane.b32.xlu0 %v937, %s978
    %v980 = vpop.permute.xlu0 %979
    %s982 = sor.u32 256, 88
    %983 = vbcast.lane.b32.xlu0 %v937, %s982
    %v984 = vpop.permute.xlu0 %983
    %s986 = sor.u32 256, 96
    %987 = vbcast.lane.b32.xlu0 %v937, %s986
    %v988 = vpop.permute.xlu0 %987
    %s990 = sor.u32 256, 104
    %991 = vbcast.lane.b32.xlu0 %v937, %s990
    %v992 = vpop.permute.xlu0 %991
    %s994 = sor.u32 256, 112
    %995 = vbcast.lane.b32.xlu0 %v937, %s994
    %v996 = vpop.permute.xlu0 %995
    %s998 = sor.u32 256, 120
    %999 = vbcast.lane.b32.xlu0 %v937, %s998
    %v1000 = vpop.permute.xlu0 %999
    %v1001 = vlaneseq
    %v1002 = vshrl.u32 %v1001, 7
    %v1003 = vsub.s32 0, %v1002
    %v1004 = vrot.slane %v933, %v1003
    %1006 = vbcast.lane.b32.xlu0 %v1004, 256
    %v1007 = vpop.permute.xlu0 %1006
    %s1009 = sor.u32 256, 8
    %1010 = vbcast.lane.b32.xlu0 %v1004, %s1009
    %v1011 = vpop.permute.xlu0 %1010
    %s1013 = sor.u32 256, 16
    %1014 = vbcast.lane.b32.xlu0 %v1004, %s1013
    %v1015 = vpop.permute.xlu0 %1014
    %s1017 = sor.u32 256, 24
    %1018 = vbcast.lane.b32.xlu0 %v1004, %s1017
    %v1019 = vpop.permute.xlu0 %1018
    %s1021 = sor.u32 256, 32
    %1022 = vbcast.lane.b32.xlu0 %v1004, %s1021
    %v1023 = vpop.permute.xlu0 %1022
    %s1025 = sor.u32 256, 40
    %1026 = vbcast.lane.b32.xlu0 %v1004, %s1025
    %v1027 = vpop.permute.xlu0 %1026
    %s1029 = sor.u32 256, 48
    %1030 = vbcast.lane.b32.xlu0 %v1004, %s1029
    %v1031 = vpop.permute.xlu0 %1030
    %s1033 = sor.u32 256, 56
    %1034 = vbcast.lane.b32.xlu0 %v1004, %s1033
    %v1035 = vpop.permute.xlu0 %1034
    %s1037 = sor.u32 256, 64
    %1038 = vbcast.lane.b32.xlu0 %v1004, %s1037
    %v1039 = vpop.permute.xlu0 %1038
    %s1041 = sor.u32 256, 72
    %1042 = vbcast.lane.b32.xlu0 %v1004, %s1041
    %v1043 = vpop.permute.xlu0 %1042
    %s1045 = sor.u32 256, 80
    %1046 = vbcast.lane.b32.xlu0 %v1004, %s1045
    %v1047 = vpop.permute.xlu0 %1046
    %s1049 = sor.u32 256, 88
    %1050 = vbcast.lane.b32.xlu0 %v1004, %s1049
    %v1051 = vpop.permute.xlu0 %1050
    %s1053 = sor.u32 256, 96
    %1054 = vbcast.lane.b32.xlu0 %v1004, %s1053
    %v1055 = vpop.permute.xlu0 %1054
    %s1057 = sor.u32 256, 104
    %1058 = vbcast.lane.b32.xlu0 %v1004, %s1057
    %v1059 = vpop.permute.xlu0 %1058
    %s1061 = sor.u32 256, 112
    %1062 = vbcast.lane.b32.xlu0 %v1004, %s1061
    %v1063 = vpop.permute.xlu0 %1062
    %s1065 = sor.u32 256, 120
    %1066 = vbcast.lane.b32.xlu0 %v1004, %s1065
    %v1067 = vpop.permute.xlu0 %1066
    %v1068 = vlaneseq
    %v1069 = vshrl.u32 %v1068, 7
    %v1070 = vsub.s32 1, %v1069
    %v1071 = vrot.slane %v931, %v1070
    %1073 = vbcast.lane.b32.xlu0 %v1071, 256
    %v1074 = vpop.permute.xlu0 %1073
    %s1076 = sor.u32 256, 8
    %1077 = vbcast.lane.b32.xlu0 %v1071, %s1076
    %v1078 = vpop.permute.xlu0 %1077
    %s1080 = sor.u32 256, 16
    %1081 = vbcast.lane.b32.xlu0 %v1071, %s1080
    %v1082 = vpop.permute.xlu0 %1081
    %s1084 = sor.u32 256, 24
    %1085 = vbcast.lane.b32.xlu0 %v1071, %s1084
    %v1086 = vpop.permute.xlu0 %1085
    %s1088 = sor.u32 256, 32
    %1089 = vbcast.lane.b32.xlu0 %v1071, %s1088
    %v1090 = vpop.permute.xlu0 %1089
    %s1092 = sor.u32 256, 40
    %1093 = vbcast.lane.b32.xlu0 %v1071, %s1092
    %v1094 = vpop.permute.xlu0 %1093
    %s1096 = sor.u32 256, 48
    %1097 = vbcast.lane.b32.xlu0 %v1071, %s1096
    %v1098 = vpop.permute.xlu0 %1097
    %s1100 = sor.u32 256, 56
    %1101 = vbcast.lane.b32.xlu0 %v1071, %s1100
    %v1102 = vpop.permute.xlu0 %1101
    %s1104 = sor.u32 256, 64
    %1105 = vbcast.lane.b32.xlu0 %v1071, %s1104
    %v1106 = vpop.permute.xlu0 %1105
    %s1108 = sor.u32 256, 72
    %1109 = vbcast.lane.b32.xlu0 %v1071, %s1108
    %v1110 = vpop.permute.xlu0 %1109
    %s1112 = sor.u32 256, 80
    %1113 = vbcast.lane.b32.xlu0 %v1071, %s1112
    %v1114 = vpop.permute.xlu0 %1113
    %s1116 = sor.u32 256, 88
    %1117 = vbcast.lane.b32.xlu0 %v1071, %s1116
    %v1118 = vpop.permute.xlu0 %1117
    %s1120 = sor.u32 256, 96
    %1121 = vbcast.lane.b32.xlu0 %v1071, %s1120
    %v1122 = vpop.permute.xlu0 %1121
    %s1124 = sor.u32 256, 104
    %1125 = vbcast.lane.b32.xlu0 %v1071, %s1124
    %v1126 = vpop.permute.xlu0 %1125
    %s1128 = sor.u32 256, 112
    %1129 = vbcast.lane.b32.xlu0 %v1071, %s1128
    %v1130 = vpop.permute.xlu0 %1129
    %s1132 = sor.u32 256, 120
    %1133 = vbcast.lane.b32.xlu0 %v1071, %s1132
    %v1134 = vpop.permute.xlu0 %1133
    %v1135 = vlaneseq
    %v1136 = vshrl.u32 %v1135, 7
    %v1137 = vsub.s32 1, %v1136
    %v1138 = vrot.slane %v933, %v1137
    %1140 = vbcast.lane.b32.xlu0 %v1138, 256
    %v1141 = vpop.permute.xlu0 %1140
    %s1143 = sor.u32 256, 8
    %1144 = vbcast.lane.b32.xlu0 %v1138, %s1143
    %v1145 = vpop.permute.xlu0 %1144
    %s1147 = sor.u32 256, 16
    %1148 = vbcast.lane.b32.xlu0 %v1138, %s1147
    %v1149 = vpop.permute.xlu0 %1148
    %s1151 = sor.u32 256, 24
    %1152 = vbcast.lane.b32.xlu0 %v1138, %s1151
    %v1153 = vpop.permute.xlu0 %1152
    %s1155 = sor.u32 256, 32
    %1156 = vbcast.lane.b32.xlu0 %v1138, %s1155
    %v1157 = vpop.permute.xlu0 %1156
    %s1159 = sor.u32 256, 40
    %1160 = vbcast.lane.b32.xlu0 %v1138, %s1159
    %v1161 = vpop.permute.xlu0 %1160
    %s1163 = sor.u32 256, 48
    %1164 = vbcast.lane.b32.xlu0 %v1138, %s1163
    %v1165 = vpop.permute.xlu0 %1164
    %s1167 = sor.u32 256, 56
    %1168 = vbcast.lane.b32.xlu0 %v1138, %s1167
    %v1169 = vpop.permute.xlu0 %1168
    %s1171 = sor.u32 256, 64
    %1172 = vbcast.lane.b32.xlu0 %v1138, %s1171
    %v1173 = vpop.permute.xlu0 %1172
    %s1175 = sor.u32 256, 72
    %1176 = vbcast.lane.b32.xlu0 %v1138, %s1175
    %v1177 = vpop.permute.xlu0 %1176
    %s1179 = sor.u32 256, 80
    %1180 = vbcast.lane.b32.xlu0 %v1138, %s1179
    %v1181 = vpop.permute.xlu0 %1180
    %s1183 = sor.u32 256, 88
    %1184 = vbcast.lane.b32.xlu0 %v1138, %s1183
    %v1185 = vpop.permute.xlu0 %1184
    %s1187 = sor.u32 256, 96
    %1188 = vbcast.lane.b32.xlu0 %v1138, %s1187
    %v1189 = vpop.permute.xlu0 %1188
    %s1191 = sor.u32 256, 104
    %1192 = vbcast.lane.b32.xlu0 %v1138, %s1191
    %v1193 = vpop.permute.xlu0 %1192
    %s1195 = sor.u32 256, 112
    %1196 = vbcast.lane.b32.xlu0 %v1138, %s1195
    %v1197 = vpop.permute.xlu0 %1196
    %s1199 = sor.u32 256, 120
    %1200 = vbcast.lane.b32.xlu0 %v1138, %s1199
    %v1201 = vpop.permute.xlu0 %1200
    %v1202 = vmul.f32 %v35, %v940
    %v1203 = vmul.f32 %v36, %v944
    %v1204 = vmul.f32 %v37, %v948
    %v1205 = vmul.f32 %v38, %v952
    %v1206 = vmul.f32 %v39, %v956
    %v1207 = vmul.f32 %v40, %v960
    %v1208 = vmul.f32 %v41, %v964
    %v1209 = vmul.f32 %v42, %v968
    %v1210 = vmul.f32 %v43, %v972
    %v1211 = vmul.f32 %v44, %v976
    %v1212 = vmul.f32 %v45, %v980
    %v1213 = vmul.f32 %v46, %v984
    %v1214 = vmul.f32 %v47, %v988
    %v1215 = vmul.f32 %v48, %v992
    %v1216 = vmul.f32 %v49, %v996
    %v1217 = vmul.f32 %v50, %v1000
    %v1218 = vmul.f32 %v51, %v1007
    %v1219 = vmul.f32 %v52, %v1011
    %v1220 = vmul.f32 %v53, %v1015
    %v1221 = vmul.f32 %v54, %v1019
    %v1222 = vmul.f32 %v55, %v1023
    %v1223 = vmul.f32 %v56, %v1027
    %v1224 = vmul.f32 %v57, %v1031
    %v1225 = vmul.f32 %v58, %v1035
    %v1226 = vmul.f32 %v59, %v1039
    %v1227 = vmul.f32 %v60, %v1043
    %v1228 = vmul.f32 %v61, %v1047
    %v1229 = vmul.f32 %v62, %v1051
    %v1230 = vmul.f32 %v63, %v1055
    %v1231 = vmul.f32 %v64, %v1059
    %v1232 = vmul.f32 %v65, %v1063
    %v1233 = vmul.f32 %v66, %v1067
    %v1234 = vmul.f32 %v67, %v1074
    %v1235 = vmul.f32 %v68, %v1078
    %v1236 = vmul.f32 %v69, %v1082
    %v1237 = vmul.f32 %v70, %v1086
    %v1238 = vmul.f32 %v71, %v1090
    %v1239 = vmul.f32 %v72, %v1094
    %v1240 = vmul.f32 %v73, %v1098
    %v1241 = vmul.f32 %v74, %v1102
    %v1242 = vmul.f32 %v75, %v1106
    %v1243 = vmul.f32 %v76, %v1110
    %v1244 = vmul.f32 %v77, %v1114
    %v1245 = vmul.f32 %v78, %v1118
    %v1246 = vmul.f32 %v79, %v1122
    %v1247 = vmul.f32 %v80, %v1126
    %v1248 = vmul.f32 %v81, %v1130
    %v1249 = vmul.f32 %v82, %v1134
    %v1250 = vmul.f32 %v83, %v1141
    %v1251 = vmul.f32 %v84, %v1145
    %v1252 = vmul.f32 %v85, %v1149
    %v1253 = vmul.f32 %v86, %v1153
    %v1254 = vmul.f32 %v87, %v1157
    %v1255 = vmul.f32 %v88, %v1161
    %v1256 = vmul.f32 %v89, %v1165
    %v1257 = vmul.f32 %v90, %v1169
    %v1258 = vmul.f32 %v91, %v1173
    %v1259 = vmul.f32 %v92, %v1177
    %v1260 = vmul.f32 %v93, %v1181
    %v1261 = vmul.f32 %v94, %v1185
    %v1262 = vmul.f32 %v95, %v1189
    %v1263 = vmul.f32 %v96, %v1193
    %v1264 = vmul.f32 %v97, %v1197
    %v1265 = vmul.f32 %v98, %v1201
    %1266 = vst [vmem:[#allocation5] sm:$0xff] %v1202
    %1267 = vst [vmem:[#allocation5 + $0x8] sm:$0xff] %v1203
    %1268 = vst [vmem:[#allocation5 + $0x10] sm:$0xff] %v1204
    %1269 = vst [vmem:[#allocation5 + $0x18] sm:$0xff] %v1205
    %1270 = vst [vmem:[#allocation5 + $0x20] sm:$0xff] %v1206
    %1271 = vst [vmem:[#allocation5 + $0x28] sm:$0xff] %v1207
    %1272 = vst [vmem:[#allocation5 + $0x30] sm:$0xff] %v1208
    %1273 = vst [vmem:[#allocation5 + $0x38] sm:$0xff] %v1209
    %1274 = vst [vmem:[#allocation5 + $0x40] sm:$0xff] %v1210
    %1275 = vst [vmem:[#allocation5 + $0x48] sm:$0xff] %v1211
    %1276 = vst [vmem:[#allocation5 + $0x50] sm:$0xff] %v1212
    %1277 = vst [vmem:[#allocation5 + $0x58] sm:$0xff] %v1213
    %1278 = vst [vmem:[#allocation5 + $0x60] sm:$0xff] %v1214
    %1279 = vst [vmem:[#allocation5 + $0x68] sm:$0xff] %v1215
    %1280 = vst [vmem:[#allocation5 + $0x70] sm:$0xff] %v1216
    %1281 = vst [vmem:[#allocation5 + $0x78] sm:$0xff] %v1217
    %1282 = vst [vmem:[#allocation5 + $0x80] sm:$0xff] %v1218
    %1283 = vst [vmem:[#allocation5 + $0x88] sm:$0xff] %v1219
    %1284 = vst [vmem:[#allocation5 + $0x90] sm:$0xff] %v1220
    %1285 = vst [vmem:[#allocation5 + $0x98] sm:$0xff] %v1221
    %1286 = vst [vmem:[#allocation5 + $0xa0] sm:$0xff] %v1222
    %1287 = vst [vmem:[#allocation5 + $0xa8] sm:$0xff] %v1223
    %1288 = vst [vmem:[#allocation5 + $0xb0] sm:$0xff] %v1224
    %1289 = vst [vmem:[#allocation5 + $0xb8] sm:$0xff] %v1225
    %1290 = vst [vmem:[#allocation5 + $0xc0] sm:$0xff] %v1226
    %1291 = vst [vmem:[#allocation5 + $0xc8] sm:$0xff] %v1227
    %1292 = vst [vmem:[#allocation5 + $0xd0] sm:$0xff] %v1228
    %1293 = vst [vmem:[#allocation5 + $0xd8] sm:$0xff] %v1229
    %1294 = vst [vmem:[#allocation5 + $0xe0] sm:$0xff] %v1230
    %1295 = vst [vmem:[#allocation5 + $0xe8] sm:$0xff] %v1231
    %1296 = vst [vmem:[#allocation5 + $0xf0] sm:$0xff] %v1232
    %1297 = vst [vmem:[#allocation5 + $0xf8] sm:$0xff] %v1233
    %1298 = vst [vmem:[#allocation5 + $0x100] sm:$0xff] %v1234
    %1299 = vst [vmem:[#allocation5 + $0x108] sm:$0xff] %v1235
    %1300 = vst [vmem:[#allocation5 + $0x110] sm:$0xff] %v1236
    %1301 = vst [vmem:[#allocation5 + $0x118] sm:$0xff] %v1237
    %1302 = vst [vmem:[#allocation5 + $0x120] sm:$0xff] %v1238
    %1303 = vst [vmem:[#allocation5 + $0x128] sm:$0xff] %v1239
    %1304 = vst [vmem:[#allocation5 + $0x130] sm:$0xff] %v1240
    %1305 = vst [vmem:[#allocation5 + $0x138] sm:$0xff] %v1241
    %1306 = vst [vmem:[#allocation5 + $0x140] sm:$0xff] %v1242
    %1307 = vst [vmem:[#allocation5 + $0x148] sm:$0xff] %v1243
    %1308 = vst [vmem:[#allocation5 + $0x150] sm:$0xff] %v1244
    %1309 = vst [vmem:[#allocation5 + $0x158] sm:$0xff] %v1245
    %1310 = vst [vmem:[#allocation5 + $0x160] sm:$0xff] %v1246
    %1311 = vst [vmem:[#allocation5 + $0x168] sm:$0xff] %v1247
    %1312 = vst [vmem:[#allocation5 + $0x170] sm:$0xff] %v1248
    %1313 = vst [vmem:[#allocation5 + $0x178] sm:$0xff] %v1249
    %1314 = vst [vmem:[#allocation5 + $0x180] sm:$0xff] %v1250
    %1315 = vst [vmem:[#allocation5 + $0x188] sm:$0xff] %v1251
    %1316 = vst [vmem:[#allocation5 + $0x190] sm:$0xff] %v1252
    %1317 = vst [vmem:[#allocation5 + $0x198] sm:$0xff] %v1253
    %1318 = vst [vmem:[#allocation5 + $0x1a0] sm:$0xff] %v1254
    %1319 = vst [vmem:[#allocation5 + $0x1a8] sm:$0xff] %v1255
    %1320 = vst [vmem:[#allocation5 + $0x1b0] sm:$0xff] %v1256
    %1321 = vst [vmem:[#allocation5 + $0x1b8] sm:$0xff] %v1257
    %1322 = vst [vmem:[#allocation5 + $0x1c0] sm:$0xff] %v1258
    %1323 = vst [vmem:[#allocation5 + $0x1c8] sm:$0xff] %v1259
    %1324 = vst [vmem:[#allocation5 + $0x1d0] sm:$0xff] %v1260
    %1325 = vst [vmem:[#allocation5 + $0x1d8] sm:$0xff] %v1261
    %1326 = vst [vmem:[#allocation5 + $0x1e0] sm:$0xff] %v1262
    %1327 = vst [vmem:[#allocation5 + $0x1e8] sm:$0xff] %v1263
    %1328 = vst [vmem:[#allocation5 + $0x1f0] sm:$0xff] %v1264
    %1329 = vst [vmem:[#allocation5 + $0x1f8] sm:$0xff] %v1265
    // Predicated region
    $region26: #{tpu_custom_call.1} parent=1 // pred_check
      _
    $region27: #{tpu_custom_call.1} parent=1 // pred_check_branch
      %1331 = sbr.rel (0) target = $region29
    $region28: #{tpu_custom_call.1} parent=1 // pred_region
      %s1333 = ssub.s32 8192, 8192
      %1334 = vsyncadd [#allocation4], %s1333
      %s1335 = sshll.u32 [#allocation5], 4
      %s1336 = int_to_ptr.vmem [resolvable:$true] %s1335
      %1341 = dma.vmem_to_hbm [thread:$0]  %s1336, 8192, %s5, [#allocation4], 128, 128, 8
    $region29: #{tpu_custom_call.1} parent=1 // pred_fallthru
      _
    // Predicated region
    $region30: #{tpu_custom_call.1} parent=1 // pred_check
      _
    $region31: #{tpu_custom_call.1} parent=1 // pred_check_branch
      %1343 = sbr.rel (0) target = $region33
    $region32: #{tpu_custom_call.1} parent=1 // pred_region
      %1344 = dma.done [#allocation4], 8192
    $region33: #{tpu_custom_call.1} parent=1 // pred_fallthru
      _
    %1345 = vsyncpa [#allocation3], 1
    %1346 = vsyncpa [#allocation4], 1

</llo_original>
